<compile_context>
chip_gen: v6e
topology: v6e:2x2x1
jax: 0.10.0
libtpu: 0.0.40
codegen_flags: <defaults>
</compile_context>

<pallas_src>
import functools

import jax
import jax.numpy as jnp
from jax.experimental import pallas as pl
from jax.experimental.pallas import tpu as pltpu


def _ls_ce_kernel(x_ref, tgt_ref, out_ref, *, smoothing, n_total):
    i = pl.program_id(0)

    x = x_ref[...]                                   # (tile_n, C), native dtype
    tgt = tgt_ref[...]                               # (tile_n, 1) int32
    tile_n, c = x.shape

    # Single hoisted f32 cast; everything below reuses it (avoids duplicate
    # bf16->f32 converts and keeps v5e, which has no bf16 VPU/EUP, happy).
    xf = x.astype(jnp.float32)                                       # (tile_n, C)

    # Merged weighted reduction:
    #   (1-s)*x_t + (s/C)*sum_x == sum(x * [(1-s)*onehot + s/C])
    col = jax.lax.broadcasted_iota(jnp.int32, x.shape, 1)            # (tile_n, C)
    onehot = col == tgt                                              # (tile_n, C)
    base_w = jnp.float32(smoothing / c)
    tgt_w = jnp.float32((1.0 - smoothing) + smoothing / c)
    weighted = jnp.sum(xf * jnp.where(onehot, tgt_w, base_w),
                       axis=-1, keepdims=True)                       # (tile_n, 1)

    # Numerically-stable log-sum-exp (EUP exp/log; f32 throughout).
    m = jnp.max(xf, axis=-1, keepdims=True)                          # (tile_n, 1)
    s = jnp.sum(jnp.exp(xf - m), axis=-1, keepdims=True)             # (tile_n, 1)
    lse = m + jnp.log(s)                                             # (tile_n, 1)

    # Fused label-smoothing CE per row (logprobs never materialized).
    loss_row = lse - weighted                                        # (tile_n, 1)

    # Mask rows beyond the global N (ragged last tile reads padded garbage;
    # keep this as an elementwise select so NaN/inf can't reach the sum).
    row = jax.lax.broadcasted_iota(jnp.int32, (tile_n, 1), 0)
    valid = (i * tile_n + row) < n_total
    loss_row = jnp.where(valid, loss_row, 0.0)

    # One partial sum per grid step, replicated across a lane-dense (8, 128)
    # block so the store is an unmasked vst.
    block_sum = jnp.sum(loss_row, axis=0, keepdims=True)             # (1, 1)
    out_ref[...] = jnp.broadcast_to(block_sum.reshape(1, 1, 1), out_ref.shape)


def label_smoothing_cross_entropy(x, target, smoothing=0.1, tile_n=None):
    """x: (N, C) float, target: (N,) int. Returns scalar float32 loss.

    NOTE: out-of-range targets contribute a zero gather term (no ignore_index
    handling, same as the PyTorch module which would error on OOB indices).
    """
    n, c = x.shape
    itemsize = jnp.dtype(x.dtype).itemsize

    # VMEM capacity per chip (v5e/v6e: 128 MiB, v7x: 64 MiB); fall back to the
    # conservative v7x figure if the query is unavailable.
    try:
        vmem_cap = int(pltpu.get_tpu_info().vmem_capacity_bytes)
    except Exception:  # noqa: BLE001 - best-effort hardware query
        vmem_cap = 64 * 1024 * 1024
    vmem_limit = int(vmem_cap * 0.8)

    # Per-row block bytes: double-buffered input + ~5 block-sized f32
    # temporaries the body creates (cast, weights, product, x - m, exp(x - m)).
    per_row = c * (2 * itemsize + 5 * 4)
    max_rows = max(8, (vmem_limit // per_row) // 8 * 8)

    # Aim for >= ~4 MiB x blocks (memory-bound kernel: large tiles amortize
    # the ~0.35 us per-step overhead and reach the HBM roofline).
    if tile_n is None:
        target_bytes = 4 * 1024 * 1024
        tile_n = max(8, (pl.cdiv(target_bytes, c * itemsize) + 7) // 8 * 8)
    else:
        tile_n = max(8, (int(tile_n) // 8) * 8)
    tile_n = min(tile_n, max_rows)

    # v7x megacore: keep >= 2 grid steps (one per TensorCore) as long as the
    # resulting block stays >= ~2 MiB. No effect on single-core v5e/v6e.
    half = max(8, ((pl.cdiv(n, 2) + 7) // 8) * 8)
    if half < tile_n and half * c * itemsize >= 2 * 1024 * 1024:
        tile_n = half

    if n <= tile_n:
        tile_n = n                               # single block: full-dim rows are legal

    grid0 = pl.cdiv(n, tile_n)
    tgt2d = target.astype(jnp.int32).reshape(n, 1)

    cost = pl.CostEstimate(
        flops=5 * n * c,
        transcendentals=n * c,
        bytes_accessed=n * c * itemsize + n * 4 + grid0 * 8 * 128 * 4,
    )

    partials = pl.pallas_call(
        functools.partial(_ls_ce_kernel, smoothing=float(smoothing), n_total=n),
        out_shape=jax.ShapeDtypeStruct((grid0, 8, 128), jnp.float32),
        grid=(grid0,),
        in_specs=[
            pl.BlockSpec((tile_n, c), lambda i: (i, 0)),
            pl.BlockSpec((tile_n, 1), lambda i: (i, 0)),
        ],
        out_specs=pl.BlockSpec((1, 8, 128), lambda i: (i, 0, 0)),
        compiler_params=pltpu.CompilerParams(
            dimension_semantics=("parallel",),
            vmem_limit_bytes=vmem_limit,
        ),
        cost_estimate=cost,
    )(x, tgt2d)

    # Final reduction and mean over the *global* N in plain JAX.
    return jnp.sum(partials[:, 0, 0]) / n


def _reference(x, target, smoothing=0.1):
    logprobs = jax.nn.log_softmax(x.astype(jnp.float32), axis=-1)
    nll = -jnp.take_along_axis(logprobs, target[:, None], axis=-1)[:, 0]
    smooth = -jnp.mean(logprobs, axis=-1)
    loss = (1.0 - smoothing) * nll + smoothing * smooth
    return jnp.mean(loss)


if __name__ == "__main__":
    key = jax.random.PRNGKey(0)
    kx, kt = jax.random.split(key)
    N, C = 16, 128
    x = jax.random.normal(kx, (N, C), dtype=jnp.float32)
    target = jax.random.randint(kt, (N,), 0, C, dtype=jnp.int32)

    # tile_n=8 -> 2 grid steps at this small demo size (exercises the pipeline
    # and the parallel row grid); production callers leave tile_n=None for the
    # auto-sized >=4 MiB blocks.
    loss = label_smoothing_cross_entropy(x, target, smoothing=0.1, tile_n=8)
    loss = jax.block_until_ready(loss)

    ref = _reference(x, target, smoothing=0.1)
    assert jnp.allclose(loss, ref, rtol=1e-5, atol=1e-5), (loss, ref)

    # Also exercise the auto-tiling path (single block here).
    loss_auto = jax.block_until_ready(
        label_smoothing_cross_entropy(x, target, smoothing=0.1))
    assert jnp.allclose(loss_auto, ref, rtol=1e-5, atol=1e-5), (loss_auto, ref)

    print("KERNEL_OK")
</pallas_src>

<mosaic_0001>
module attributes {stable_mosaic.version = 11 : i64} {
  func.func @_ls_ce_kernel(%arg0: i32, %arg1: memref<8x128xf32, #tpu.memory_space<vmem>>, %arg2: memref<8x1xi32, #tpu.memory_space<vmem>>, %arg3: memref<1x8x128xf32, #tpu.memory_space<vmem>>) attributes {dimension_semantics = [#tpu.dimension_semantics<parallel>], iteration_bounds = array<i64: 2>, scalar_prefetch = 0 : i64, scratch_operands = 0 : i64, tpu.core_type = #tpu.core_type<tc>, window_params = [{transform_indices = @transform_0, window_bounds = array<i64: 8, 128>}, {transform_indices = @transform_1, window_bounds = array<i64: 8, 1>}, {transform_indices = @transform_2, window_bounds = array<i64: 1, 8, 128>}]} {
    %c0 = arith.constant 0 : index
    %c0_0 = arith.constant 0 : index
    %0 = vector.load %arg1[%c0, %c0_0] : memref<8x128xf32, #tpu.memory_space<vmem>>, vector<8x128xf32>
    %c0_1 = arith.constant 0 : index
    %c0_2 = arith.constant 0 : index
    %1 = vector.load %arg2[%c0_1, %c0_2] : memref<8x1xi32, #tpu.memory_space<vmem>>, vector<8x1xi32>
    %2 = tpu.iota {dimensions = array<i32: 1>} : vector<8x128xi32>
    %3 = vector.broadcast %1 : vector<8x1xi32> to vector<8x128xi32>
    %4 = arith.cmpi eq, %2, %3 : vector<8x128xi32>
    %cst = arith.constant 0.900781273 : f32
    %cst_3 = arith.constant 7.812500e-04 : f32
    %5 = vector.broadcast %cst : f32 to vector<8x128xf32>
    %6 = vector.broadcast %cst_3 : f32 to vector<8x128xf32>
    %7 = arith.select %4, %5, %6 : vector<8x128xi1>, vector<8x128xf32>
    %8 = arith.mulf %0, %7 : vector<8x128xf32>
    %cst_4 = arith.constant dense<0.000000e+00> : vector<8xf32>
    %9 = vector.multi_reduction <add>, %8, %cst_4 [1] : vector<8x128xf32> to vector<8xf32>
    %10 = vector.shape_cast %9 : vector<8xf32> to vector<8x1xf32>
    %cst_5 = arith.constant dense<0xFF800000> : vector<8xf32>
    %11 = vector.multi_reduction <maximumf>, %0, %cst_5 [1] : vector<8x128xf32> to vector<8xf32>
    %12 = vector.shape_cast %11 : vector<8xf32> to vector<8x1xf32>
    %13 = vector.broadcast %12 : vector<8x1xf32> to vector<8x128xf32>
    %14 = arith.subf %0, %13 : vector<8x128xf32>
    %15 = math.exp %14 : vector<8x128xf32>
    %cst_6 = arith.constant dense<0.000000e+00> : vector<8xf32>
    %16 = vector.multi_reduction <add>, %15, %cst_6 [1] : vector<8x128xf32> to vector<8xf32>
    %17 = vector.shape_cast %16 : vector<8xf32> to vector<8x1xf32>
    %18 = math.log %17 : vector<8x1xf32>
    %19 = arith.addf %12, %18 : vector<8x1xf32>
    %20 = arith.subf %19, %10 : vector<8x1xf32>
    %21 = tpu.iota {dimensions = array<i32: 0>} : vector<8x1xi32>
    %c8_i32 = arith.constant 8 : i32
    %22 = arith.muli %arg0, %c8_i32 : i32
    %23 = vector.broadcast %22 : i32 to vector<8x1xi32>
    %24 = arith.addi %23, %21 : vector<8x1xi32>
    %c16_i32 = arith.constant 16 : i32
    %25 = vector.broadcast %c16_i32 : i32 to vector<8x1xi32>
    %26 = arith.cmpi slt, %24, %25 : vector<8x1xi32>
    %cst_7 = arith.constant 0.000000e+00 : f32
    %27 = vector.broadcast %cst_7 : f32 to vector<8x1xf32>
    %28 = arith.select %26, %20, %27 : vector<8x1xi1>, vector<8x1xf32>
    %cst_8 = arith.constant dense<0.000000e+00> : vector<1xf32>
    %29 = vector.multi_reduction <add>, %28, %cst_8 [0] : vector<8x1xf32> to vector<1xf32>
    %30 = vector.shape_cast %29 : vector<1xf32> to vector<1x1xf32>
    %31 = vector.shape_cast %30 : vector<1x1xf32> to vector<1x1x1xf32>
    %32 = vector.shape_cast %31 : vector<1x1x1xf32> to vector<1x1x1xf32>
    %33 = vector.broadcast %32 : vector<1x1x1xf32> to vector<1x8x128xf32>
    %c0_9 = arith.constant 0 : index
    %c0_10 = arith.constant 0 : index
    %c0_11 = arith.constant 0 : index
    %34 = vector.load %arg3[%c0_9, %c0_10, %c0_11] : memref<1x8x128xf32, #tpu.memory_space<vmem>>, vector<1x8x128xf32>
    tpu.vector_store %arg3[%c0_9, %c0_10, %c0_11], %33 {strides = array<i32>} : memref<1x8x128xf32, #tpu.memory_space<vmem>>, vector<1x8x128xf32>,
    return
  }
  func.func @transform_0(%arg0: i32) -> (i32, i32) {
    %c0_i32 = arith.constant 0 : i32
    %c0_i32_0 = arith.constant 0 : i32
    return %arg0, %c0_i32 : i32, i32
  }
  func.func @transform_1(%arg0: i32) -> (i32, i32) {
    %c0_i32 = arith.constant 0 : i32
    %c0_i32_0 = arith.constant 0 : i32
    return %arg0, %c0_i32 : i32, i32
  }
  func.func @transform_2(%arg0: i32) -> (i32, i32, i32) {
    %c0_i32 = arith.constant 0 : i32
    %c0_i32_0 = arith.constant 0 : i32
    %c0_i32_1 = arith.constant 0 : i32
    return %arg0, %c0_i32, %c0_i32_0 : i32, i32, i32
  }
}

</mosaic_0001>

<llo_original>
// kernel: tpu_custom_call.1
$region0: #{tpu_custom_call.1}
  #allocation0 [shape = 'u32[]', space=smem, size = 0x4, offset = 0x4, fixed_abs, tag = 'smem constant byte address 0x4 - core index']
  #allocation1 [shape = 'u32[144,128]{1,0:T(1,128)}', space=vmem, size = 0x12000, scoped, tag = 'internal scratch']
  %s0 = inlined_call_operand.vmem [shape: f32[16,128], index: 0, kind: input, shape index: {}]
  %s1 = inlined_call_operand.vmem [shape: s32[16,1], index: 1, kind: input, shape index: {}]
  %s2 = inlined_call_operand.hbm [shape: f32[2,8,128], index: 2, kind: output, shape index: {}]
  %s3 = sld [smem:[#allocation0]]
  $region41: #{tpu_custom_call.1} parent=0
    _
  %s5 = ssub.s32 1, %s3
  %s6 = scalar_select 0, %s5, %s3
  $region1: #{tpu_custom_call.1} parent=0
    #allocation2 [shape = 'u8[8192]{0}', space=vmem, size = 0x2000, scoped, tag = 'output window, operand 0']
    #allocation3 [shape = 's32[2]{0}', space=sflag, size = 0x8, scoped, tag = 'scoped memory for tpu_custom_call.1']
    %7 = vsyncpa [#allocation3], 0
    %s8 = scalar_lea.sflag [#allocation3], 1
    %9 = vsyncpa %s8, 0
    loop: start=0, step=1, limit=4
    $region2: #{tpu_custom_call.1} parent=1 // loop_pre_header
      _
    $region3: #{tpu_custom_call.1} parent=1 // loop_header
      %s11 = sphi 0, %s15
      %p12 = scmp.ge.s32.totalorder %s11, 4
      %s21 = sphi 0, %s23
      %s24 = sphi 0, %s21
      %s25 = sphi 0, %s24
      %s41 = sphi 0, %s25
      %s47 = sphi 0, %s49
      %s50 = sphi 0, %s47
      %s51 = sphi 0, %s50
      %s67 = sphi 0, %s51
      %s73 = sphi 0, %s75
      %s76 = sphi 0, %s73
      %s77 = sphi 0, %s76
      %s93 = sphi 0, %s77
    $region4: #{tpu_custom_call.1} parent=1 // loop_header_branch
      %14 = sbr.rel (%p12) target = $region8
    $region5: #{tpu_custom_call.1} parent=1 // loop_body
      %s16 = ssub.s32 %s11, 1
      %s17 = ssub.s32 %s11, 2
      %s18 = sadd.s32 %s11, 1
      %s19 = ssub.s32 %s11, %s18
      %p20 = scmp.eq.s32.totalorder %s19, 0
      %s22 = sadd.s32 %s21, 1
      %s23 = scalar_select %p20, %s21, %s22
      %p26 = pneg %p20
      %p27 = scmp.eq.s32.totalorder %s11, 1
      %p28 = por %p26, %p27
      %p29 = scmp.ne.s32.totalorder %s21, %s24
      %p30 = scmp.eq.s32.totalorder %s11, 0
      %p31 = por %p29, %p30
      %p32 = scmp.ne.s32.totalorder %s21, %s24
      %p33 = scmp.eq.s32.totalorder %s16, 1
      %p34 = por %p32, %p33
      %p35 = scmp.ne.s32.totalorder %s24, %s25
      %p36 = scmp.eq.s32.totalorder %s16, 0
      %p37 = por %p35, %p36
      %p38 = scmp.ne.s32.totalorder %s24, %s25
      %p39 = scmp.eq.s32.totalorder %s17, 1
      %p40 = por %p38, %p39
      %p42 = scmp.ne.s32.totalorder %s25, %s41
      %p43 = scmp.eq.s32.totalorder %s17, 0
      %p44 = por %p42, %p43
      %s45 = ssub.s32 %s11, %s18
      %p46 = scmp.eq.s32.totalorder %s45, 0
      %s48 = sadd.s32 %s47, 1
      %s49 = scalar_select %p46, %s47, %s48
      %p52 = pneg %p46
      %p53 = scmp.eq.s32.totalorder %s11, 1
      %p54 = por %p52, %p53
      %p55 = scmp.ne.s32.totalorder %s47, %s50
      %p56 = scmp.eq.s32.totalorder %s11, 0
      %p57 = por %p55, %p56
      %p58 = scmp.ne.s32.totalorder %s47, %s50
      %p59 = scmp.eq.s32.totalorder %s16, 1
      %p60 = por %p58, %p59
      %p61 = scmp.ne.s32.totalorder %s50, %s51
      %p62 = scmp.eq.s32.totalorder %s16, 0
      %p63 = por %p61, %p62
      %p64 = scmp.ne.s32.totalorder %s50, %s51
      %p65 = scmp.eq.s32.totalorder %s17, 1
      %p66 = por %p64, %p65
      %p68 = scmp.ne.s32.totalorder %s51, %s67
      %p69 = scmp.eq.s32.totalorder %s17, 0
      %p70 = por %p68, %p69
      %s71 = ssub.s32 %s11, %s18
      %p72 = scmp.eq.s32.totalorder %s71, 0
      %s74 = sadd.s32 %s73, 1
      %s75 = scalar_select %p72, %s73, %s74
      %p78 = pneg %p72
      %p79 = scmp.eq.s32.totalorder %s11, 1
      %p80 = por %p78, %p79
      %p81 = scmp.ne.s32.totalorder %s73, %s76
      %p82 = scmp.eq.s32.totalorder %s11, 0
      %p83 = por %p81, %p82
      %p84 = scmp.ne.s32.totalorder %s73, %s76
      %p85 = scmp.eq.s32.totalorder %s16, 1
      %p86 = por %p84, %p85
      %p87 = scmp.ne.s32.totalorder %s76, %s77
      %p88 = scmp.eq.s32.totalorder %s16, 0
      %p89 = por %p87, %p88
      %p90 = scmp.ne.s32.totalorder %s76, %s77
      %p91 = scmp.eq.s32.totalorder %s17, 1
      %p92 = por %p90, %p91
      %p94 = scmp.ne.s32.totalorder %s77, %s93
      %p95 = scmp.eq.s32.totalorder %s17, 0
      %p96 = por %p94, %p95
      %p97 = scmp.le.s32.totalorder 1, %s11
      %p98 = scmp.lt.s32.totalorder %s11, 3
      %p99 = pnand %p97, %p98
      %p100 = pneg %p99
      // Predicated region
      $region9: #{tpu_custom_call.1} parent=5 // pred_check
        _
      $region10: #{tpu_custom_call.1} parent=5 // pred_check_branch
        %102 = sbr.rel (%p99) target = $region12
      $region11: #{tpu_custom_call.1} parent=5 // pred_region
        %s103 = ssub.s32 %s11, 1
      $region12: #{tpu_custom_call.1} parent=5 // pred_fallthru
        _
      %p104 = scmp.lt.s32.totalorder %s11, 2
      // Predicated region
      $region13: #{tpu_custom_call.1} parent=5 // pred_check
        %p105 = pneg %p104
      $region14: #{tpu_custom_call.1} parent=5 // pred_check_branch
        %107 = sbr.rel (%p105) target = $region16
      $region15: #{tpu_custom_call.1} parent=5 // pred_region
        // Predicated region
        $region17: #{tpu_custom_call.1} parent=15 // pred_check
          %p108 = pneg %p31
        $region18: #{tpu_custom_call.1} parent=15 // pred_check_branch
          %110 = sbr.rel (%p108) target = $region20
        $region19: #{tpu_custom_call.1} parent=15 // pred_region
          %p111 = scmp.lt.s32.totalorder %s11, 1
          %s112 = scalar_select %p111, %s11, 1
          %s113 = smul.addr %s112, 8
          %s114 = scalar_lea.vmem %s0, %s113
        $region20: #{tpu_custom_call.1} parent=15 // pred_fallthru
          _
        // Predicated region
        $region21: #{tpu_custom_call.1} parent=15 // pred_check
          %p115 = pneg %p57
        $region22: #{tpu_custom_call.1} parent=15 // pred_check_branch
          %117 = sbr.rel (%p115) target = $region24
        $region23: #{tpu_custom_call.1} parent=15 // pred_region
          %p118 = scmp.lt.s32.totalorder %s11, 1
          %s119 = scalar_select %p118, %s11, 1
          %s120 = smul.addr %s119, 8
          %s121 = scalar_lea.vmem %s1, %s120
        $region24: #{tpu_custom_call.1} parent=15 // pred_fallthru
          _
      $region16: #{tpu_custom_call.1} parent=5 // pred_fallthru
        _
      %p122 = scmp.le.s32.totalorder 1, %s11
      %p123 = scmp.lt.s32.totalorder %s11, 3
      %p124 = pnand %p122, %p123
      %p125 = pneg %p124
      // Predicated region
      $region25: #{tpu_custom_call.1} parent=5 // pred_check
        _
      $region26: #{tpu_custom_call.1} parent=5 // pred_check_branch
        %127 = sbr.rel (%p124) target = $region28
      $region27: #{tpu_custom_call.1} parent=5 // pred_region
        %s128 = ssub.s32 %s11, 1
        %p129 = scmp.lt.s32.totalorder %s16, 1
        %s130 = scalar_select %p129, %s16, 1
        %s131 = smul.addr %s130, 8
        %s132 = scalar_lea.vmem %s0, %s131
        %p133 = pneg %p37
        %p134 = pneg %p34
        %p135 = scmp.lt.s32.totalorder %s16, 1
        %s136 = scalar_select %p135, %s16, 1
        %s137 = smul.addr %s136, 8
        %s138 = scalar_lea.vmem %s1, %s137
        %p139 = pneg %p63
        %p140 = pneg %p60
        %p141 = pneg %p89
        %p142 = pneg %p86
        %s143 = sand.u32 %s76, 1
        %s144 = scalar_lea.sflag [#allocation3], %s143
        %s145 = sand.u32 %s76, 1
        %s146 = smul.addr %s145, 8
        %s147 = scalar_lea.vmem [#allocation2], %s146
        %p148 = scmp.lt.s32.totalorder %s16, 1
        %s149 = scalar_select %p148, %s16, 1
        %s150 = smul.addr %s149, 8
        %s151 = scalar_lea.vmem %s0, %s150
        %p152 = scmp.lt.s32.totalorder %s16, 1
        %s153 = scalar_select %p152, %s16, 1
        %s154 = smul.addr %s153, 8
        %s155 = scalar_lea.vmem %s1, %s154
        %v156 = vld [vmem:[%s151] sm:$0xff]
        %v157 = vld [vmem:[%s155] sm:$0xff]
        %v158 = vlaneseq
        %v159 = vand.u32 %v158, 127
        %160 = vset.pattern.permute.xlu0 0
        %161 = vperm.xlu0 %160, %v157
        %v162 = vpop.permute.xlu0 %161
        %vm163 = vcmp.eq.s32.totalorder %v159, %v162
        %v164 = vsel %vm163, 0.9007813, 0.00078125
        %v165 = vmul.f32 %v156, %v164
        %166 = vadd.xlane.f32.xlu0 %v165
        %v167 = vpop.xlane.xlu0 %166
        %168 = vmax.xlane.f32.xlu0 %v156
        %v169 = vpop.xlane.xlu0 %168
        %v170 = vsub.f32 %v156, %v169
        %v171 = vmul.f32 %v170, 1.442695
        %v172 = vpow.pop %v171
        %173 = vadd.xlane.f32.xlu0 %v172
        %v174 = vpop.xlane.xlu0 %173
        %v175 = vlog2.pop %v174
        %v176 = vmul.f32 %v175, 0.6931472
        %v177 = vadd.f32 %v169, %v176
        %v178 = vsub.f32 %v177, %v167
        %v179 = vlaneseq
        %v180 = vshrl.u32 %v179, 7
        %s181 = smul.u32 %s16, 8
        %v182 = vstv %s181
        %v183 = vadd.s32 %v182, %v180
        %vm184 = vcmp.lt.s32.totalorder %v183, 16
        %v185 = vsel %vm184, %v178, 0.0
        %v186 = vrot.slane %v185, 4
        %v187 = vadd.f32 %v185, %v186
        %v188 = vrot.slane %v187, 2
        %v189 = vadd.f32 %v187, %v188
        %v190 = vrot.slane %v189, 1
        %v191 = vadd.f32 %v189, %v190
        %192 = vst [vmem:[%s147] sm:$0xff] %v191
        %s193 = sand.u32 %s76, 1
        %s194 = scalar_lea.sflag [#allocation3], %s193
        %s195 = sand.u32 %s76, 1
        %s196 = smul.addr %s195, 8
        %s197 = scalar_lea.vmem [#allocation2], %s196
        // Predicated region
        $region29: #{tpu_custom_call.1} parent=27 // pred_check
          %p198 = pneg %p86
        $region30: #{tpu_custom_call.1} parent=27 // pred_check_branch
          %200 = sbr.rel (%p198) target = $region32
        $region31: #{tpu_custom_call.1} parent=27 // pred_region
          %s202 = ssub.s32 128, 128
          %203 = vsyncadd %s194, %s202
          %s204 = smul.addr %s16, 128
          %s205 = scalar_lea.hbm %s2, %s204
          %s207 = sshll.u32 %s197, 4
          %s208 = int_to_ptr.vmem [resolvable:$true] %s207
          %210 = dma.vmem_to_hbm [thread:$0]  %s208, 128, %s205, %s194
        $region32: #{tpu_custom_call.1} parent=27 // pred_fallthru
          _
      $region28: #{tpu_custom_call.1} parent=5 // pred_fallthru
        _
      %p211 = scmp.le.s32.totalorder 2, %s11
      // Predicated region
      $region33: #{tpu_custom_call.1} parent=5 // pred_check
        %p212 = pneg %p211
      $region34: #{tpu_custom_call.1} parent=5 // pred_check_branch
        %214 = sbr.rel (%p212) target = $region36
      $region35: #{tpu_custom_call.1} parent=5 // pred_region
        %s215 = ssub.s32 %s11, 2
        // Predicated region
        $region37: #{tpu_custom_call.1} parent=35 // pred_check
          %p216 = pneg %p92
        $region38: #{tpu_custom_call.1} parent=35 // pred_check_branch
          %218 = sbr.rel (%p216) target = $region40
        $region39: #{tpu_custom_call.1} parent=35 // pred_region
          %s219 = sand.u32 %s77, 1
          %s220 = scalar_lea.sflag [#allocation3], %s219
          %s221 = sand.u32 %s77, 1
          %s222 = smul.addr %s221, 8
          %s223 = scalar_lea.vmem [#allocation2], %s222
          %224 = dma.done %s220, 128
        $region40: #{tpu_custom_call.1} parent=35 // pred_fallthru
          _
      $region36: #{tpu_custom_call.1} parent=5 // pred_fallthru
        _
    $region6: #{tpu_custom_call.1} parent=1 // loop_footer
      %s15 = sadd.s32 1, %s11
    $region7: #{tpu_custom_call.1} parent=1 // loop_footer_branch
      %10 = sbr.rel target = $region3
    $region8: #{tpu_custom_call.1} parent=1 // loop_exit
      _
    %225 = vsyncpa [#allocation3], 1
    %s226 = scalar_lea.sflag [#allocation3], 1
    %227 = vsyncpa %s226, 1

</llo_original>
